<compile_context>
chip_gen: v7x
topology: tpu7x:2x2x1
jax: 0.10.0
libtpu: 0.0.40
codegen_flags: <defaults>
</compile_context>

<pallas_src>
import jax
import jax.numpy as jnp
from jax.experimental import pallas as pl
from jax.experimental.pallas import tpu as pltpu

LANE = 128


def _round_up(x, m):
    return (x + m - 1) // m * m


def _pick_batch_tile(b):
    """MXU-M-filling batch tile, per TPU generation."""
    try:
        kind = jax.devices()[0].device_kind.lower()
    except Exception:  # pragma: no cover - defensive
        kind = ""
    mxu_m = 128 if "v5" in kind else 256       # v5e: 128-wide MXU M; v6e/v7x: 256
    if "v7" in kind and b > mxu_m:
        # v7x has 2 TensorCores/chip: make sure the "parallel" batch axis has at
        # least 2 grid steps so both cores get work.
        return min(mxu_m, _round_up(pl.cdiv(b, 2), 16))
    return min(mxu_m, _round_up(b, 16))


def graph_pmf_kernel(su_feat_ref, sv_feat_ref,
                     wa_ref, wb_ref, bf_ref, w2_ref, b2_ref,
                     emb_ref):
    """One batch tile of the folded encoder + Linear->ReLU->Linear head.

    h   = relu(su_feat @ Wa + sv_feat @ Wb + b_fold)      (encoder folded into W1)
    emb = h @ W2_pad + b2_pad                              (lane-dense N=128 store)
    """
    f32, bf16 = jnp.float32, jnp.bfloat16

    # Features arrive f32; cast to bf16 on the VPU (idle slots) for the MXU.
    su = su_feat_ref[...].astype(bf16)
    sv = sv_feat_ref[...].astype(bf16)

    h = (jnp.dot(su, wa_ref[...], preferred_element_type=f32)
         + jnp.dot(sv, wb_ref[...], preferred_element_type=f32)
         + bf_ref[...])
    h = jnp.maximum(h, 0.0)                     # get_act(...) -> ReLU, f32 on the VPU

    emb_ref[...] = (jnp.dot(h.astype(bf16), w2_ref[...], preferred_element_type=f32)
                    + b2_ref[...])


def graph_pmf_forward(solutes_feat, solvents_feat, solute_idx, solvent_idx, params,
                      *, tb=None):
    """Fused Pallas MLP; gather + PMF row-dot stay in plain JAX (per perf review)."""
    B, F = solutes_feat.shape
    C = params["w1"].shape[0]
    C2 = C // 2
    c_pad = _round_up(C, LANE)

    # --- fold encoder linears into the first MLP layer (exact in f32, one bf16 cast) ---
    w1a = params["w1"][:C2, :]                  # (C/2, C)
    w1b = params["w1"][C2:, :]
    wa = (params["wu"] @ w1a).astype(jnp.bfloat16)                   # (F, C)
    wb = (params["wv"] @ w1b).astype(jnp.bfloat16)                   # (F, C)
    b_fold = params["bu"] @ w1a + params["bv"] @ w1b + params["b1"]  # (1, C), f32

    # --- lane-dense output: zero-pad second layer to N=128, slice back below ---
    w2p = jnp.pad(params["w2"], ((0, 0), (0, c_pad - C))).astype(jnp.bfloat16)
    b2p = jnp.pad(params["b2"], ((0, 0), (0, c_pad - C)))

    # --- batch tiling (no array padding; Pallas masks the ragged last block) ---
    if tb is None:
        tb = _pick_batch_tile(B)
    nb = pl.cdiv(B, tb)

    def batch_spec(last_dim):
        return pl.BlockSpec((tb, last_dim), lambda i: (i, 0))

    def resident(arr):  # weights/biases: same block every step -> stays in VMEM
        return pl.BlockSpec(arr.shape, lambda i: (0, 0))

    emb = pl.pallas_call(
        graph_pmf_kernel,
        out_shape=jax.ShapeDtypeStruct((B, c_pad), jnp.float32),
        grid=(nb,),
        in_specs=[
            batch_spec(F),                      # solutes pooled features (f32)
            batch_spec(F),                      # solvents pooled features (f32)
            resident(wa), resident(wb), resident(b_fold),
            resident(w2p), resident(b2p),
        ],
        out_specs=pl.BlockSpec((tb, c_pad), lambda i: (i, 0)),
        compiler_params=pltpu.CompilerParams(dimension_semantics=("parallel",)),
    )(solutes_feat, solvents_feat, wa, wb, b_fold, w2p, b2p)

    solutes_prior_params = emb[:, :C2]
    solvents_prior_params = emb[:, C2:C]

    # PMF estimate: per-pair dot of gathered latent factor rows.  Kept in plain JAX
    # (1-lane output + tiny reduce gain nothing from kernel fusion at these sizes).
    pmf_estimate = jnp.sum(params["U"][solute_idx] * params["V"][solvent_idx],
                           axis=-1, keepdims=True)

    return solutes_prior_params, solvents_prior_params, pmf_estimate


def _reference(solutes_feat, solvents_feat, solute_idx, solvent_idx, p):
    su = solutes_feat @ p["wu"] + p["bu"]
    sv = solvents_feat @ p["wv"] + p["bv"]
    cat = jnp.concatenate([su, sv], axis=-1)
    emb = jnp.maximum(cat @ p["w1"] + p["b1"], 0.0) @ p["w2"] + p["b2"]
    C2 = p["w1"].shape[0] // 2
    pmf = jnp.sum(p["U"][solute_idx] * p["V"][solvent_idx], axis=-1, keepdims=True)
    return emb[:, :C2], emb[:, C2:], pmf


if __name__ == "__main__":
    B = 40         # number of (solute, solvent) pairs in the batch
    F = 24         # pooled molecule feature dim
    C = 32         # channels (lin in/out features); prior params are C//2 = 16 each
    D = 16         # PMF latent dim
    N_SOLUTES, N_SOLVENTS = 10, 12

    key = jax.random.PRNGKey(0)
    ks = jax.random.split(key, 12)

    solutes_feat = jax.random.normal(ks[0], (B, F), jnp.float32)
    solvents_feat = jax.random.normal(ks[1], (B, F), jnp.float32)
    solute_idx = jax.random.randint(ks[2], (B,), 0, N_SOLUTES)
    solvent_idx = jax.random.randint(ks[3], (B,), 0, N_SOLVENTS)

    params = {
        # graph-encoder stand-ins
        "wu": jax.random.normal(ks[4], (F, C // 2), jnp.float32) * 0.1,
        "bu": jax.random.normal(ks[5], (1, C // 2), jnp.float32) * 0.1,
        "wv": jax.random.normal(ks[6], (F, C // 2), jnp.float32) * 0.1,
        "bv": jax.random.normal(ks[7], (1, C // 2), jnp.float32) * 0.1,
        # self.lin = Linear(C, C) -> ReLU -> Linear(C, C)
        "w1": jax.random.normal(ks[8], (C, C), jnp.float32) * 0.1,
        "b1": jnp.zeros((1, C), jnp.float32),
        "w2": jax.random.normal(ks[9], (C, C), jnp.float32) * 0.1,
        "b2": jnp.zeros((1, C), jnp.float32),
        # pmf_model latent factor tables
        "U": jax.random.normal(ks[10], (N_SOLUTES, D), jnp.float32) * 0.1,
        "V": jax.random.normal(ks[11], (N_SOLVENTS, D), jnp.float32) * 0.1,
    }

    su_ref, sv_ref, pmf_ref = _reference(
        solutes_feat, solvents_feat, solute_idx, solvent_idx, params)

    # Exercise the multi-block grid with a ragged last block (tb=16 -> 3 steps over
    # B=40) and the default single-tile path (tb rounded up past B).
    for tb in (16, None):
        su_out, sv_out, pmf_out = graph_pmf_forward(
            solutes_feat, solvents_feat, solute_idx, solvent_idx, params, tb=tb)
        jax.block_until_ready((su_out, sv_out, pmf_out))

        assert su_out.shape == (B, C // 2)
        assert sv_out.shape == (B, C // 2)
        assert pmf_out.shape == (B, 1)
        # bf16 MXU operands vs f32 reference -> loose-but-safe tolerances.
        assert jnp.allclose(su_out, su_ref, rtol=2e-2, atol=2e-2)
        assert jnp.allclose(sv_out, sv_ref, rtol=2e-2, atol=2e-2)
        assert jnp.allclose(pmf_out, pmf_ref, rtol=1e-5, atol=1e-5)

    print("KERNEL_OK")
</pallas_src>

<mosaic_0001>
module attributes {stable_mosaic.version = 11 : i64} {
  func.func @graph_pmf_kernel(%arg0: i32, %arg1: memref<16x24xf32, #tpu.memory_space<vmem>>, %arg2: memref<16x24xf32, #tpu.memory_space<vmem>>, %arg3: memref<24x32xbf16, #tpu.memory_space<vmem>>, %arg4: memref<24x32xbf16, #tpu.memory_space<vmem>>, %arg5: memref<1x32xf32, #tpu.memory_space<vmem>>, %arg6: memref<32x128xbf16, #tpu.memory_space<vmem>>, %arg7: memref<1x128xf32, #tpu.memory_space<vmem>>, %arg8: memref<16x128xf32, #tpu.memory_space<vmem>>) attributes {dimension_semantics = [#tpu.dimension_semantics<parallel>], iteration_bounds = array<i64: 3>, scalar_prefetch = 0 : i64, scratch_operands = 0 : i64, tpu.core_type = #tpu.core_type<tc>, window_params = [{transform_indices = @transform_0, window_bounds = array<i64: 16, 24>}, {transform_indices = @transform_1, window_bounds = array<i64: 16, 24>}, {pipeline_mode = #tpu.pipeline_mode<synchronous>, transform_indices = @transform_2, window_bounds = array<i64: 24, 32>}, {pipeline_mode = #tpu.pipeline_mode<synchronous>, transform_indices = @transform_3, window_bounds = array<i64: 24, 32>}, {pipeline_mode = #tpu.pipeline_mode<synchronous>, transform_indices = @transform_4, window_bounds = array<i64: 1, 32>}, {pipeline_mode = #tpu.pipeline_mode<synchronous>, transform_indices = @transform_5, window_bounds = array<i64: 32, 128>}, {pipeline_mode = #tpu.pipeline_mode<synchronous>, transform_indices = @transform_6, window_bounds = array<i64: 1, 128>}, {transform_indices = @transform_7, window_bounds = array<i64: 16, 128>}]} {
    %c0 = arith.constant 0 : index
    %c0_0 = arith.constant 0 : index
    %0 = vector.load %arg1[%c0, %c0_0] : memref<16x24xf32, #tpu.memory_space<vmem>>, vector<16x24xf32>
    %1 = arith.truncf %0 : vector<16x24xf32> to vector<16x24xbf16>
    %c0_1 = arith.constant 0 : index
    %c0_2 = arith.constant 0 : index
    %2 = vector.load %arg2[%c0_1, %c0_2] : memref<16x24xf32, #tpu.memory_space<vmem>>, vector<16x24xf32>
    %3 = arith.truncf %2 : vector<16x24xf32> to vector<16x24xbf16>
    %c0_3 = arith.constant 0 : index
    %c0_4 = arith.constant 0 : index
    %4 = vector.load %arg3[%c0_3, %c0_4] : memref<24x32xbf16, #tpu.memory_space<vmem>>, vector<24x32xbf16>
    %cst = arith.constant dense<0.000000e+00> : vector<16x32xf32>
    %5 = tpu.matmul %1, %4, %cst {dimension_numbers = #tpu.dot_dimension_numbers<[1], [0], [0], [1], [0, 0, 1, 1], [], []>} : vector<16x24xbf16>, vector<24x32xbf16>, vector<16x32xf32> -> vector<16x32xf32>
    %c0_5 = arith.constant 0 : index
    %c0_6 = arith.constant 0 : index
    %6 = vector.load %arg4[%c0_5, %c0_6] : memref<24x32xbf16, #tpu.memory_space<vmem>>, vector<24x32xbf16>
    %cst_7 = arith.constant dense<0.000000e+00> : vector<16x32xf32>
    %7 = tpu.matmul %3, %6, %cst_7 {dimension_numbers = #tpu.dot_dimension_numbers<[1], [0], [0], [1], [0, 0, 1, 1], [], []>} : vector<16x24xbf16>, vector<24x32xbf16>, vector<16x32xf32> -> vector<16x32xf32>
    %8 = arith.addf %5, %7 : vector<16x32xf32>
    %c0_8 = arith.constant 0 : index
    %c0_9 = arith.constant 0 : index
    %9 = vector.load %arg5[%c0_8, %c0_9] : memref<1x32xf32, #tpu.memory_space<vmem>>, vector<1x32xf32>
    %10 = vector.broadcast %9 : vector<1x32xf32> to vector<16x32xf32>
    %11 = arith.addf %8, %10 : vector<16x32xf32>
    %cst_10 = arith.constant 0.000000e+00 : f32
    %12 = vector.broadcast %cst_10 : f32 to vector<16x32xf32>
    %13 = arith.maximumf %11, %12 : vector<16x32xf32>
    %14 = arith.truncf %13 : vector<16x32xf32> to vector<16x32xbf16>
    %c0_11 = arith.constant 0 : index
    %c0_12 = arith.constant 0 : index
    %15 = vector.load %arg6[%c0_11, %c0_12] : memref<32x128xbf16, #tpu.memory_space<vmem>>, vector<32x128xbf16>
    %cst_13 = arith.constant dense<0.000000e+00> : vector<16x128xf32>
    %16 = tpu.matmul %14, %15, %cst_13 {dimension_numbers = #tpu.dot_dimension_numbers<[1], [0], [0], [1], [0, 0, 1, 1], [], []>} : vector<16x32xbf16>, vector<32x128xbf16>, vector<16x128xf32> -> vector<16x128xf32>
    %c0_14 = arith.constant 0 : index
    %c0_15 = arith.constant 0 : index
    %17 = vector.load %arg7[%c0_14, %c0_15] : memref<1x128xf32, #tpu.memory_space<vmem>>, vector<1x128xf32>
    %18 = vector.broadcast %17 : vector<1x128xf32> to vector<16x128xf32>
    %19 = arith.addf %16, %18 : vector<16x128xf32>
    %c0_16 = arith.constant 0 : index
    %c0_17 = arith.constant 0 : index
    %20 = vector.load %arg8[%c0_16, %c0_17] : memref<16x128xf32, #tpu.memory_space<vmem>>, vector<16x128xf32>
    tpu.vector_store %arg8[%c0_16, %c0_17], %19 {strides = array<i32>} : memref<16x128xf32, #tpu.memory_space<vmem>>, vector<16x128xf32>,
    return
  }
  func.func @transform_0(%arg0: i32) -> (i32, i32) {
    %c0_i32 = arith.constant 0 : i32
    %c0_i32_0 = arith.constant 0 : i32
    return %arg0, %c0_i32 : i32, i32
  }
  func.func @transform_1(%arg0: i32) -> (i32, i32) {
    %c0_i32 = arith.constant 0 : i32
    %c0_i32_0 = arith.constant 0 : i32
    return %arg0, %c0_i32 : i32, i32
  }
  func.func @transform_2(%arg0: i32) -> (i32, i32) {
    %c0_i32 = arith.constant 0 : i32
    %c0_i32_0 = arith.constant 0 : i32
    %c0_i32_1 = arith.constant 0 : i32
    return %c0_i32, %c0_i32_0 : i32, i32
  }
  func.func @transform_3(%arg0: i32) -> (i32, i32) {
    %c0_i32 = arith.constant 0 : i32
    %c0_i32_0 = arith.constant 0 : i32
    %c0_i32_1 = arith.constant 0 : i32
    return %c0_i32, %c0_i32_0 : i32, i32
  }
  func.func @transform_4(%arg0: i32) -> (i32, i32) {
    %c0_i32 = arith.constant 0 : i32
    %c0_i32_0 = arith.constant 0 : i32
    %c0_i32_1 = arith.constant 0 : i32
    return %c0_i32, %c0_i32_0 : i32, i32
  }
  func.func @transform_5(%arg0: i32) -> (i32, i32) {
    %c0_i32 = arith.constant 0 : i32
    %c0_i32_0 = arith.constant 0 : i32
    %c0_i32_1 = arith.constant 0 : i32
    return %c0_i32, %c0_i32_0 : i32, i32
  }
  func.func @transform_6(%arg0: i32) -> (i32, i32) {
    %c0_i32 = arith.constant 0 : i32
    %c0_i32_0 = arith.constant 0 : i32
    %c0_i32_1 = arith.constant 0 : i32
    return %c0_i32, %c0_i32_0 : i32, i32
  }
  func.func @transform_7(%arg0: i32) -> (i32, i32) {
    %c0_i32 = arith.constant 0 : i32
    %c0_i32_0 = arith.constant 0 : i32
    return %arg0, %c0_i32 : i32, i32
  }
}

</mosaic_0001>

<llo_original>
// kernel: tpu_custom_call.1
$region0: #{tpu_custom_call.1}
  #allocation0 [shape = 'u32[]', space=smem, size = 0x4, offset = 0x4, fixed_abs, tag = 'smem constant byte address 0x4 - core index']
  #allocation1 [shape = 'u32[144,128]{1,0:T(1,128)}', space=vmem, size = 0x12000, scoped, tag = 'internal scratch']
  %s0 = inlined_call_operand.vmem [shape: f32[40,24], index: 0, kind: input, shape index: {}]
  %s1 = inlined_call_operand.vmem [shape: f32[40,24], index: 1, kind: input, shape index: {}]
  %s2 = inlined_call_operand.vmem [shape: bf16[24,32], index: 2, kind: input, shape index: {}]
  %s3 = inlined_call_operand.vmem [shape: bf16[24,32], index: 3, kind: input, shape index: {}]
  %s4 = inlined_call_operand.vmem [shape: f32[1,32], index: 4, kind: input, shape index: {}]
  %s5 = inlined_call_operand.vmem [shape: bf16[32,128], index: 5, kind: input, shape index: {}]
  %s6 = inlined_call_operand.vmem [shape: f32[1,128], index: 6, kind: input, shape index: {}]
  %s7 = inlined_call_operand.hbm [shape: f32[40,128], index: 7, kind: output, shape index: {}]
  %s8 = sld [smem:[#allocation0]]
  $region61: #{tpu_custom_call.1} parent=0
    _
  %s10 = ssub.s32 1, %s8
  %s11 = scalar_select 0, %s10, %s8
  $region1: #{tpu_custom_call.1} parent=0
    #allocation2 [shape = 'u8[16384]{0}', space=vmem, size = 0x4000, scoped, tag = 'output window, operand 0']
    #allocation3 [shape = 's32[2]{0}', space=sflag, size = 0x8, scoped, tag = 'scoped memory for tpu_custom_call.1']
    %12 = vsyncpa [#allocation3], 0
    %s13 = scalar_lea.sflag [#allocation3], 1
    %14 = vsyncpa %s13, 0
    loop: start=0, step=1, limit=5
    $region2: #{tpu_custom_call.1} parent=1 // loop_pre_header
      _
    $region3: #{tpu_custom_call.1} parent=1 // loop_header
      %s16 = sphi 0, %s20
      %p17 = scmp.ge.s32.totalorder %s16, 5
      %s26 = sphi 0, %s28
      %s29 = sphi 0, %s26
      %s30 = sphi 0, %s29
      %s46 = sphi 0, %s30
      %s52 = sphi 0, %s54
      %s55 = sphi 0, %s52
      %s56 = sphi 0, %s55
      %s72 = sphi 0, %s56
      %s76 = sphi 0, %s76
      %s78 = sphi 0, %s76
      %s79 = sphi 0, %s78
      %s93 = sphi 0, %s79
      %s97 = sphi 0, %s97
      %s99 = sphi 0, %s97
      %s100 = sphi 0, %s99
      %s114 = sphi 0, %s100
      %s118 = sphi 0, %s118
      %s120 = sphi 0, %s118
      %s121 = sphi 0, %s120
      %s135 = sphi 0, %s121
      %s139 = sphi 0, %s139
      %s141 = sphi 0, %s139
      %s142 = sphi 0, %s141
      %s156 = sphi 0, %s142
      %s160 = sphi 0, %s160
      %s162 = sphi 0, %s160
      %s163 = sphi 0, %s162
      %s177 = sphi 0, %s163
      %s183 = sphi 0, %s185
      %s186 = sphi 0, %s183
      %s187 = sphi 0, %s186
      %s203 = sphi 0, %s187
    $region4: #{tpu_custom_call.1} parent=1 // loop_header_branch
      %19 = sbr.rel (%p17) target = $region8
    $region5: #{tpu_custom_call.1} parent=1 // loop_body
      %s21 = ssub.s32 %s16, 1
      %s22 = ssub.s32 %s16, 2
      %s23 = sadd.s32 %s16, 1
      %s24 = ssub.s32 %s16, %s23
      %p25 = scmp.eq.s32.totalorder %s24, 0
      %s27 = sadd.s32 %s26, 1
      %s28 = scalar_select %p25, %s26, %s27
      %p31 = pneg %p25
      %p32 = scmp.eq.s32.totalorder %s16, 2
      %p33 = por %p31, %p32
      %p34 = scmp.ne.s32.totalorder %s26, %s29
      %p35 = scmp.eq.s32.totalorder %s16, 0
      %p36 = por %p34, %p35
      %p37 = scmp.ne.s32.totalorder %s26, %s29
      %p38 = scmp.eq.s32.totalorder %s21, 2
      %p39 = por %p37, %p38
      %p40 = scmp.ne.s32.totalorder %s29, %s30
      %p41 = scmp.eq.s32.totalorder %s21, 0
      %p42 = por %p40, %p41
      %p43 = scmp.ne.s32.totalorder %s29, %s30
      %p44 = scmp.eq.s32.totalorder %s22, 2
      %p45 = por %p43, %p44
      %p47 = scmp.ne.s32.totalorder %s30, %s46
      %p48 = scmp.eq.s32.totalorder %s22, 0
      %p49 = por %p47, %p48
      %s50 = ssub.s32 %s16, %s23
      %p51 = scmp.eq.s32.totalorder %s50, 0
      %s53 = sadd.s32 %s52, 1
      %s54 = scalar_select %p51, %s52, %s53
      %p57 = pneg %p51
      %p58 = scmp.eq.s32.totalorder %s16, 2
      %p59 = por %p57, %p58
      %p60 = scmp.ne.s32.totalorder %s52, %s55
      %p61 = scmp.eq.s32.totalorder %s16, 0
      %p62 = por %p60, %p61
      %p63 = scmp.ne.s32.totalorder %s52, %s55
      %p64 = scmp.eq.s32.totalorder %s21, 2
      %p65 = por %p63, %p64
      %p66 = scmp.ne.s32.totalorder %s55, %s56
      %p67 = scmp.eq.s32.totalorder %s21, 0
      %p68 = por %p66, %p67
      %p69 = scmp.ne.s32.totalorder %s55, %s56
      %p70 = scmp.eq.s32.totalorder %s22, 2
      %p71 = por %p69, %p70
      %p73 = scmp.ne.s32.totalorder %s56, %s72
      %p74 = scmp.eq.s32.totalorder %s22, 0
      %p75 = por %p73, %p74
      %s77 = sadd.s32 %s76, 1
      %p80 = scmp.eq.s32.totalorder %s16, 2
      %p81 = scmp.ne.s32.totalorder %s76, %s78
      %p82 = scmp.eq.s32.totalorder %s16, 0
      %p83 = por %p81, %p82
      %p84 = scmp.ne.s32.totalorder %s76, %s78
      %p85 = scmp.eq.s32.totalorder %s21, 2
      %p86 = por %p84, %p85
      %p87 = scmp.ne.s32.totalorder %s78, %s79
      %p88 = scmp.eq.s32.totalorder %s21, 0
      %p89 = por %p87, %p88
      %p90 = scmp.ne.s32.totalorder %s78, %s79
      %p91 = scmp.eq.s32.totalorder %s22, 2
      %p92 = por %p90, %p91
      %p94 = scmp.ne.s32.totalorder %s79, %s93
      %p95 = scmp.eq.s32.totalorder %s22, 0
      %p96 = por %p94, %p95
      %s98 = sadd.s32 %s97, 1
      %p101 = scmp.eq.s32.totalorder %s16, 2
      %p102 = scmp.ne.s32.totalorder %s97, %s99
      %p103 = scmp.eq.s32.totalorder %s16, 0
      %p104 = por %p102, %p103
      %p105 = scmp.ne.s32.totalorder %s97, %s99
      %p106 = scmp.eq.s32.totalorder %s21, 2
      %p107 = por %p105, %p106
      %p108 = scmp.ne.s32.totalorder %s99, %s100
      %p109 = scmp.eq.s32.totalorder %s21, 0
      %p110 = por %p108, %p109
      %p111 = scmp.ne.s32.totalorder %s99, %s100
      %p112 = scmp.eq.s32.totalorder %s22, 2
      %p113 = por %p111, %p112
      %p115 = scmp.ne.s32.totalorder %s100, %s114
      %p116 = scmp.eq.s32.totalorder %s22, 0
      %p117 = por %p115, %p116
      %s119 = sadd.s32 %s118, 1
      %p122 = scmp.eq.s32.totalorder %s16, 2
      %p123 = scmp.ne.s32.totalorder %s118, %s120
      %p124 = scmp.eq.s32.totalorder %s16, 0
      %p125 = por %p123, %p124
      %p126 = scmp.ne.s32.totalorder %s118, %s120
      %p127 = scmp.eq.s32.totalorder %s21, 2
      %p128 = por %p126, %p127
      %p129 = scmp.ne.s32.totalorder %s120, %s121
      %p130 = scmp.eq.s32.totalorder %s21, 0
      %p131 = por %p129, %p130
      %p132 = scmp.ne.s32.totalorder %s120, %s121
      %p133 = scmp.eq.s32.totalorder %s22, 2
      %p134 = por %p132, %p133
      %p136 = scmp.ne.s32.totalorder %s121, %s135
      %p137 = scmp.eq.s32.totalorder %s22, 0
      %p138 = por %p136, %p137
      %s140 = sadd.s32 %s139, 1
      %p143 = scmp.eq.s32.totalorder %s16, 2
      %p144 = scmp.ne.s32.totalorder %s139, %s141
      %p145 = scmp.eq.s32.totalorder %s16, 0
      %p146 = por %p144, %p145
      %p147 = scmp.ne.s32.totalorder %s139, %s141
      %p148 = scmp.eq.s32.totalorder %s21, 2
      %p149 = por %p147, %p148
      %p150 = scmp.ne.s32.totalorder %s141, %s142
      %p151 = scmp.eq.s32.totalorder %s21, 0
      %p152 = por %p150, %p151
      %p153 = scmp.ne.s32.totalorder %s141, %s142
      %p154 = scmp.eq.s32.totalorder %s22, 2
      %p155 = por %p153, %p154
      %p157 = scmp.ne.s32.totalorder %s142, %s156
      %p158 = scmp.eq.s32.totalorder %s22, 0
      %p159 = por %p157, %p158
      %s161 = sadd.s32 %s160, 1
      %p164 = scmp.eq.s32.totalorder %s16, 2
      %p165 = scmp.ne.s32.totalorder %s160, %s162
      %p166 = scmp.eq.s32.totalorder %s16, 0
      %p167 = por %p165, %p166
      %p168 = scmp.ne.s32.totalorder %s160, %s162
      %p169 = scmp.eq.s32.totalorder %s21, 2
      %p170 = por %p168, %p169
      %p171 = scmp.ne.s32.totalorder %s162, %s163
      %p172 = scmp.eq.s32.totalorder %s21, 0
      %p173 = por %p171, %p172
      %p174 = scmp.ne.s32.totalorder %s162, %s163
      %p175 = scmp.eq.s32.totalorder %s22, 2
      %p176 = por %p174, %p175
      %p178 = scmp.ne.s32.totalorder %s163, %s177
      %p179 = scmp.eq.s32.totalorder %s22, 0
      %p180 = por %p178, %p179
      %s181 = ssub.s32 %s16, %s23
      %p182 = scmp.eq.s32.totalorder %s181, 0
      %s184 = sadd.s32 %s183, 1
      %s185 = scalar_select %p182, %s183, %s184
      %p188 = pneg %p182
      %p189 = scmp.eq.s32.totalorder %s16, 2
      %p190 = por %p188, %p189
      %p191 = scmp.ne.s32.totalorder %s183, %s186
      %p192 = scmp.eq.s32.totalorder %s16, 0
      %p193 = por %p191, %p192
      %p194 = scmp.ne.s32.totalorder %s183, %s186
      %p195 = scmp.eq.s32.totalorder %s21, 2
      %p196 = por %p194, %p195
      %p197 = scmp.ne.s32.totalorder %s186, %s187
      %p198 = scmp.eq.s32.totalorder %s21, 0
      %p199 = por %p197, %p198
      %p200 = scmp.ne.s32.totalorder %s186, %s187
      %p201 = scmp.eq.s32.totalorder %s22, 2
      %p202 = por %p200, %p201
      %p204 = scmp.ne.s32.totalorder %s187, %s203
      %p205 = scmp.eq.s32.totalorder %s22, 0
      %p206 = por %p204, %p205
      %p207 = scmp.le.s32.totalorder 1, %s16
      %p208 = scmp.lt.s32.totalorder %s16, 4
      %p209 = pnand %p207, %p208
      %p210 = pneg %p209
      // Predicated region
      $region9: #{tpu_custom_call.1} parent=5 // pred_check
        _
      $region10: #{tpu_custom_call.1} parent=5 // pred_check_branch
        %212 = sbr.rel (%p209) target = $region12
      $region11: #{tpu_custom_call.1} parent=5 // pred_region
        %s213 = ssub.s32 %s16, 1
        // Predicated region
        $region13: #{tpu_custom_call.1} parent=11 // pred_check
          %p214 = pneg %p89
        $region14: #{tpu_custom_call.1} parent=11 // pred_check_branch
          %216 = sbr.rel (%p214) target = $region16
        $region15: #{tpu_custom_call.1} parent=11 // pred_region
          _
        $region16: #{tpu_custom_call.1} parent=11 // pred_fallthru
          _
        // Predicated region
        $region17: #{tpu_custom_call.1} parent=11 // pred_check
          %p217 = pneg %p110
        $region18: #{tpu_custom_call.1} parent=11 // pred_check_branch
          %219 = sbr.rel (%p217) target = $region20
        $region19: #{tpu_custom_call.1} parent=11 // pred_region
          _
        $region20: #{tpu_custom_call.1} parent=11 // pred_fallthru
          _
        // Predicated region
        $region21: #{tpu_custom_call.1} parent=11 // pred_check
          %p220 = pneg %p131
        $region22: #{tpu_custom_call.1} parent=11 // pred_check_branch
          %222 = sbr.rel (%p220) target = $region24
        $region23: #{tpu_custom_call.1} parent=11 // pred_region
          _
        $region24: #{tpu_custom_call.1} parent=11 // pred_fallthru
          _
        // Predicated region
        $region25: #{tpu_custom_call.1} parent=11 // pred_check
          %p223 = pneg %p152
        $region26: #{tpu_custom_call.1} parent=11 // pred_check_branch
          %225 = sbr.rel (%p223) target = $region28
        $region27: #{tpu_custom_call.1} parent=11 // pred_region
          _
        $region28: #{tpu_custom_call.1} parent=11 // pred_fallthru
          _
        // Predicated region
        $region29: #{tpu_custom_call.1} parent=11 // pred_check
          %p226 = pneg %p173
        $region30: #{tpu_custom_call.1} parent=11 // pred_check_branch
          %228 = sbr.rel (%p226) target = $region32
        $region31: #{tpu_custom_call.1} parent=11 // pred_region
          _
        $region32: #{tpu_custom_call.1} parent=11 // pred_fallthru
          _
      $region12: #{tpu_custom_call.1} parent=5 // pred_fallthru
        _
      %p229 = scmp.lt.s32.totalorder %s16, 3
      // Predicated region
      $region33: #{tpu_custom_call.1} parent=5 // pred_check
        %p230 = pneg %p229
      $region34: #{tpu_custom_call.1} parent=5 // pred_check_branch
        %232 = sbr.rel (%p230) target = $region36
      $region35: #{tpu_custom_call.1} parent=5 // pred_region
        // Predicated region
        $region37: #{tpu_custom_call.1} parent=35 // pred_check
          %p233 = pneg %p36
        $region38: #{tpu_custom_call.1} parent=35 // pred_check_branch
          %235 = sbr.rel (%p233) target = $region40
        $region39: #{tpu_custom_call.1} parent=35 // pred_region
          %s236 = smul.u32 2, %s16
          %s237 = ssub.s32 5, %s236
          %p238 = scmp.lt.s32.totalorder %s237, 2
          %s239 = scalar_select %p238, %s237, 2
          %s240 = smul.u32 128, %s239
          %p241 = scmp.lt.s32.totalorder %s236, 4
          %s242 = scalar_select %p241, %s236, 4
          %s243 = smul.addr %s242, 8
          %s244 = scalar_lea.vmem %s0, %s243
          %s245 = smul.u32 2, %s16
          %s246 = ssub.s32 5, %s245
          %p247 = scmp.lt.s32.totalorder %s246, 2
          %s248 = scalar_select %p247, %s246, 2
          %s249 = smul.u32 128, %s248
        $region40: #{tpu_custom_call.1} parent=35 // pred_fallthru
          _
        // Predicated region
        $region41: #{tpu_custom_call.1} parent=35 // pred_check
          %p250 = pneg %p62
        $region42: #{tpu_custom_call.1} parent=35 // pred_check_branch
          %252 = sbr.rel (%p250) target = $region44
        $region43: #{tpu_custom_call.1} parent=35 // pred_region
          %s253 = smul.u32 2, %s16
          %s254 = ssub.s32 5, %s253
          %p255 = scmp.lt.s32.totalorder %s254, 2
          %s256 = scalar_select %p255, %s254, 2
          %s257 = smul.u32 128, %s256
          %p258 = scmp.lt.s32.totalorder %s253, 4
          %s259 = scalar_select %p258, %s253, 4
          %s260 = smul.addr %s259, 8
          %s261 = scalar_lea.vmem %s1, %s260
          %s262 = smul.u32 2, %s16
          %s263 = ssub.s32 5, %s262
          %p264 = scmp.lt.s32.totalorder %s263, 2
          %s265 = scalar_select %p264, %s263, 2
          %s266 = smul.u32 128, %s265
        $region44: #{tpu_custom_call.1} parent=35 // pred_fallthru
          _
      $region36: #{tpu_custom_call.1} parent=5 // pred_fallthru
        _
      %p267 = scmp.le.s32.totalorder 1, %s16
      %p268 = scmp.lt.s32.totalorder %s16, 4
      %p269 = pnand %p267, %p268
      %p270 = pneg %p269
      // Predicated region
      $region45: #{tpu_custom_call.1} parent=5 // pred_check
        _
      $region46: #{tpu_custom_call.1} parent=5 // pred_check_branch
        %272 = sbr.rel (%p269) target = $region48
      $region47: #{tpu_custom_call.1} parent=5 // pred_region
        %s273 = ssub.s32 %s16, 1
        %s274 = smul.u32 2, %s21
        %s275 = ssub.s32 5, %s274
        %p276 = scmp.lt.s32.totalorder %s275, 2
        %s277 = scalar_select %p276, %s275, 2
        %s278 = smul.u32 128, %s277
        %p279 = scmp.lt.s32.totalorder %s274, 4
        %s280 = scalar_select %p279, %s274, 4
        %s281 = smul.addr %s280, 8
        %s282 = scalar_lea.vmem %s0, %s281
        %p283 = pneg %p42
        %p284 = pneg %p39
        %s285 = smul.u32 2, %s21
        %s286 = ssub.s32 5, %s285
        %p287 = scmp.lt.s32.totalorder %s286, 2
        %s288 = scalar_select %p287, %s286, 2
        %s289 = smul.u32 128, %s288
        %p290 = scmp.lt.s32.totalorder %s285, 4
        %s291 = scalar_select %p290, %s285, 4
        %s292 = smul.addr %s291, 8
        %s293 = scalar_lea.vmem %s1, %s292
        %p294 = pneg %p68
        %p295 = pneg %p65
        %p296 = pneg %p89
        %p297 = pneg %p86
        %p298 = pneg %p110
        %p299 = pneg %p107
        %p300 = pneg %p131
        %p301 = pneg %p128
        %p302 = pneg %p152
        %p303 = pneg %p149
        %p304 = pneg %p173
        %p305 = pneg %p170
        %p306 = pneg %p199
        %p307 = pneg %p196
        %s308 = sand.u32 %s186, 1
        %s309 = scalar_lea.sflag [#allocation3], %s308
        %s310 = sand.u32 %s186, 1
        %s311 = smul.addr %s310, 16
        %s312 = scalar_lea.vmem [#allocation2], %s311
        %s313 = smul.u32 2, %s21
        %s314 = ssub.s32 5, %s313
        %p315 = scmp.lt.s32.totalorder %s314, 2
        %s316 = scalar_select %p315, %s314, 2
        %s317 = smul.u32 128, %s316
        %p318 = scmp.lt.s32.totalorder %s313, 4
        %s319 = scalar_select %p318, %s313, 4
        %s320 = smul.addr %s319, 8
        %s321 = scalar_lea.vmem %s0, %s320
        %s322 = smul.u32 2, %s21
        %s323 = ssub.s32 5, %s322
        %p324 = scmp.lt.s32.totalorder %s323, 2
        %s325 = scalar_select %p324, %s323, 2
        %s326 = smul.u32 128, %s325
        %s327 = smul.u32 2, %s21
        %s328 = ssub.s32 5, %s327
        %p329 = scmp.lt.s32.totalorder %s328, 2
        %s330 = scalar_select %p329, %s328, 2
        %s331 = smul.u32 128, %s330
        %p332 = scmp.lt.s32.totalorder %s327, 4
        %s333 = scalar_select %p332, %s327, 4
        %s334 = smul.addr %s333, 8
        %s335 = scalar_lea.vmem %s1, %s334
        %s336 = smul.u32 2, %s21
        %s337 = ssub.s32 5, %s336
        %p338 = scmp.lt.s32.totalorder %s337, 2
        %s339 = scalar_select %p338, %s337, 2
        %s340 = smul.u32 128, %s339
        %s341 = smul.u32 2, %s21
        %s342 = ssub.s32 5, %s341
        %p343 = scmp.lt.s32.totalorder %s342, 2
        %s344 = scalar_select %p343, %s342, 2
        %s345 = smul.u32 128, %s344
        %v347 = vld [vmem:[%s321] sm:$0xff]
        %v348 = vld [vmem:[%s321 + $0x8] sm:$0xff]
        %v349 = vpack.c.bf16 %v348, %v347
        %v350 = vld [vmem:[%s335] sm:$0xff]
        %v351 = vld [vmem:[%s335 + $0x8] sm:$0xff]
        %v352 = vpack.c.bf16 %v351, %v350
        %v353 = vld [vmem:[%s2] sm:$0xf]
        %v354 = vld [vmem:[%s2 + $0x4] sm:$0xf]
        %v355 = vld [vmem:[%s2 + $0x8] sm:$0xf]
        %v356 = vld [vmem:[%s3] sm:$0xf]
        %v357 = vld [vmem:[%s3 + $0x4] sm:$0xf]
        %v358 = vld [vmem:[%s3 + $0x8] sm:$0xf]
        %v362 = vunpack.c.l.b16 %v356
        %v363 = vunpack.c.l.b16 %v357
        %v364 = vunpack.c.l.b16 %v358
        %v365 = vpack.c.b16 %v363, %v362
        %v366 = vpack.c.b16 %v364, %v364
        %vm368 = vcmask 195584
        %v370 = vsel %vm368, %v352, 0
        %vm372 = vcmask 1043456
        %v374 = vsel %vm372, %v366, 0
        %376 = vmatprep.subr.bf16.mxu0 0
        %377 = vmatpush1.bf16.msra.mxu0 %v365
        %378 = vmatprep.subr.bf16.mxu0 0
        %379 = vmatpush1.bf16.msra.mxu0 %v374
        %380 = vmatprep.subr.bf16.mxu0 0
        %381 = vmatpush1.bf16.msra.mxu0 0
        %382 = vmatprep.subr.bf16.mxu0 0
        %383 = vmatpush1.bf16.msra.mxu0 0
        %384 = vmatprep.subr.bf16.mxu0 0
        %385 = vmatpush1.bf16.msra.mxu0 0
        %386 = vmatprep.subr.bf16.mxu0 0
        %387 = vmatpush1.bf16.msra.mxu0 0
        %388 = vmatprep.subr.bf16.mxu0 0
        %389 = vmatpush1.bf16.msra.mxu0 0
        %390 = vmatprep.subr.bf16.mxu0 0
        %391 = vmatpush1.bf16.msra.mxu0 0
        %392 = vmatprep.subr.bf16.mxu0 0
        %393 = vmatpush1.bf16.msra.mxu0 0
        %394 = vmatprep.subr.bf16.mxu0 0
        %395 = vmatpush1.bf16.msra.mxu0 0
        %396 = vmatprep.subr.bf16.mxu0 0
        %397 = vmatpush1.bf16.msra.mxu0 0
        %398 = vmatprep.subr.bf16.mxu0 0
        %399 = vmatpush1.bf16.msra.mxu0 0
        %400 = vmatprep.subr.bf16.mxu0 0
        %401 = vmatpush1.bf16.msra.mxu0 0
        %402 = vmatprep.subr.bf16.mxu0 0
        %403 = vmatpush1.bf16.msra.mxu0 0
        %404 = vmatprep.subr.bf16.mxu0 0
        %405 = vmatpush1.bf16.msra.mxu0 0
        %406 = vmatprep.subr.bf16.mxu0 0
        %407 = vmatpush1.bf16.msra.mxu0 0
        %408 = vmatprep.mubr.bf16.mxu0 0
        %409 = vmatmul.mubr.bf16.gmra.mrb[0].mxu0 %v370
        %v410 = vpop.f32.mrb[0].mxu0
        %v411 = vadd.f32 0.0, %v410
        %v412 = vpop.f32.mrb[0].mxu0
        %v413 = vpop.f32.mrb[0].mxu0
        %v414 = vadd.f32 0.0, %v413
        %v415 = vpop.f32.mrb[0].mxu0
        %416 = vdwg.mxu0
        %v420 = vunpack.c.l.b16 %v353
        %v421 = vunpack.c.l.b16 %v354
        %v422 = vunpack.c.l.b16 %v355
        %v423 = vpack.c.b16 %v421, %v420
        %v424 = vpack.c.b16 %v422, %v422
        %v427 = vsel %vm368, %v349, 0
        %v430 = vsel %vm372, %v424, 0
        %432 = vmatprep.subr.bf16.mxu0 0
        %433 = vmatpush1.bf16.msra.mxu0 %v423
        %434 = vmatprep.subr.bf16.mxu0 0
        %435 = vmatpush1.bf16.msra.mxu0 %v430
        %436 = vmatprep.subr.bf16.mxu0 0
        %437 = vmatpush1.bf16.msra.mxu0 0
        %438 = vmatprep.subr.bf16.mxu0 0
        %439 = vmatpush1.bf16.msra.mxu0 0
        %440 = vmatprep.subr.bf16.mxu0 0
        %441 = vmatpush1.bf16.msra.mxu0 0
        %442 = vmatprep.subr.bf16.mxu0 0
        %443 = vmatpush1.bf16.msra.mxu0 0
        %444 = vmatprep.subr.bf16.mxu0 0
        %445 = vmatpush1.bf16.msra.mxu0 0
        %446 = vmatprep.subr.bf16.mxu0 0
        %447 = vmatpush1.bf16.msra.mxu0 0
        %448 = vmatprep.subr.bf16.mxu0 0
        %449 = vmatpush1.bf16.msra.mxu0 0
        %450 = vmatprep.subr.bf16.mxu0 0
        %451 = vmatpush1.bf16.msra.mxu0 0
        %452 = vmatprep.subr.bf16.mxu0 0
        %453 = vmatpush1.bf16.msra.mxu0 0
        %454 = vmatprep.subr.bf16.mxu0 0
        %455 = vmatpush1.bf16.msra.mxu0 0
        %456 = vmatprep.subr.bf16.mxu0 0
        %457 = vmatpush1.bf16.msra.mxu0 0
        %458 = vmatprep.subr.bf16.mxu0 0
        %459 = vmatpush1.bf16.msra.mxu0 0
        %460 = vmatprep.subr.bf16.mxu0 0
        %461 = vmatpush1.bf16.msra.mxu0 0
        %462 = vmatprep.subr.bf16.mxu0 0
        %463 = vmatpush1.bf16.msra.mxu0 0
        %464 = vmatprep.mubr.bf16.mxu0 0
        %465 = vmatmul.mubr.bf16.gmra.mrb[0].mxu0 %v427
        %v466 = vpop.f32.mrb[0].mxu0
        %v467 = vadd.f32 %v411, %v466
        %v468 = vpop.f32.mrb[0].mxu0
        %v469 = vpop.f32.mrb[0].mxu0
        %v470 = vadd.f32 %v414, %v469
        %v471 = vpop.f32.mrb[0].mxu0
        %472 = vdwg.mxu0
        %v473 = vld [vmem:[%s4] sm:$0x1]
        %v475 = vlaneseq
        %v476 = vshrl.u32 %v475, 7
        %v477 = vsub.s32 0, %v476
        %v478 = vrot.slane %v473, %v477
        %v480 = vadd.f32 %v467, %v478
        %v481 = vadd.f32 %v470, %v478
        %v482 = vmax.f32 %v480, 0.0
        %v483 = vmax.f32 %v481, 0.0
        %v484 = vpack.c.bf16 %v483, %v482
        %v485 = vld [vmem:[%s5] sm:$0xf]
        %v486 = vld [vmem:[%s5 + $0x4] sm:$0xf]
        %v487 = vld [vmem:[%s5 + $0x8] sm:$0xf]
        %v488 = vld [vmem:[%s5 + $0xc] sm:$0xf]
        %v489 = vld [vmem:[%s6] sm:$0x1]
        %v491 = vlaneseq
        %v492 = vshrl.u32 %v491, 7
        %v493 = vsub.s32 0, %v492
        %v494 = vrot.slane %v489, %v493
        %v500 = vunpack.c.l.b16 %v485
        %v501 = vunpack.c.l.b16 %v486
        %v502 = vunpack.c.l.b16 %v487
        %v503 = vunpack.c.l.b16 %v488
        %v504 = vpack.c.b16 %v501, %v500
        %v505 = vpack.c.b16 %v503, %v502
        %vm508 = vcmask 261120
        %v510 = vsel %vm508, %v484, 0
        %512 = vmatprep.subr.bf16.mxu0 0
        %513 = vmatpush1.bf16.msra.mxu0 %v504
        %514 = vmatprep.subr.bf16.mxu0 0
        %515 = vmatpush1.bf16.msra.mxu0 %v505
        %516 = vmatprep.subr.bf16.mxu0 0
        %517 = vmatpush1.bf16.msra.mxu0 0
        %518 = vmatprep.subr.bf16.mxu0 0
        %519 = vmatpush1.bf16.msra.mxu0 0
        %520 = vmatprep.subr.bf16.mxu0 0
        %521 = vmatpush1.bf16.msra.mxu0 0
        %522 = vmatprep.subr.bf16.mxu0 0
        %523 = vmatpush1.bf16.msra.mxu0 0
        %524 = vmatprep.subr.bf16.mxu0 0
        %525 = vmatpush1.bf16.msra.mxu0 0
        %526 = vmatprep.subr.bf16.mxu0 0
        %527 = vmatpush1.bf16.msra.mxu0 0
        %528 = vmatprep.subr.bf16.mxu0 0
        %529 = vmatpush1.bf16.msra.mxu0 0
        %530 = vmatprep.subr.bf16.mxu0 0
        %531 = vmatpush1.bf16.msra.mxu0 0
        %532 = vmatprep.subr.bf16.mxu0 0
        %533 = vmatpush1.bf16.msra.mxu0 0
        %534 = vmatprep.subr.bf16.mxu0 0
        %535 = vmatpush1.bf16.msra.mxu0 0
        %536 = vmatprep.subr.bf16.mxu0 0
        %537 = vmatpush1.bf16.msra.mxu0 0
        %538 = vmatprep.subr.bf16.mxu0 0
        %539 = vmatpush1.bf16.msra.mxu0 0
        %540 = vmatprep.subr.bf16.mxu0 0
        %541 = vmatpush1.bf16.msra.mxu0 0
        %542 = vmatprep.subr.bf16.mxu0 0
        %543 = vmatpush1.bf16.msra.mxu0 0
        %544 = vmatprep.mubr.bf16.mxu0 0
        %545 = vmatmul.mubr.bf16.gmra.mrb[0].mxu0 %v510
        %v546 = vpop.f32.mrb[0].mxu0
        %v547 = vadd.f32 %v494, %v546
        %v548 = vpop.f32.mrb[0].mxu0
        %v549 = vpop.f32.mrb[0].mxu0
        %v550 = vadd.f32 %v494, %v549
        %v551 = vpop.f32.mrb[0].mxu0
        %552 = vdwg.mxu0
        %553 = vst [vmem:[%s312] sm:$0xff] %v547
        %554 = vst [vmem:[%s312 + $0x8] sm:$0xff] %v550
        %s555 = sand.u32 %s186, 1
        %s556 = scalar_lea.sflag [#allocation3], %s555
        %s557 = sand.u32 %s186, 1
        %s558 = smul.addr %s557, 16
        %s559 = scalar_lea.vmem [#allocation2], %s558
        // Predicated region
        $region49: #{tpu_custom_call.1} parent=47 // pred_check
          %p560 = pneg %p196
        $region50: #{tpu_custom_call.1} parent=47 // pred_check_branch
          %562 = sbr.rel (%p560) target = $region52
        $region51: #{tpu_custom_call.1} parent=47 // pred_region
          %s563 = smul.u32 2, %s21
          %s564 = ssub.s32 5, %s563
          %p565 = scmp.lt.s32.totalorder %s564, 2
          %s566 = scalar_select %p565, %s564, 2
          %s567 = smul.u32 128, %s566
          %s569 = ssub.s32 256, %s567
          %570 = vsyncadd %s556, %s569
          %p571 = scmp.ne.s32.totalorder 0, %s567
          %s572 = smul.addr %s563, 128
          %s573 = scalar_lea.hbm %s7, %s572
          %s574 = smul.u32 8, %s566
          %s575 = sshll.u32 %s559, 4
          %s576 = int_to_ptr.vmem [resolvable:$true] %s575
          %s577 = sshll.u32 %s574, 4
          %581 = dma.vmem_to_hbm [thread:$0]  (%p571), %s576, %s577, %s573, %s556, 128, 128, 8
        $region52: #{tpu_custom_call.1} parent=47 // pred_fallthru
          _
      $region48: #{tpu_custom_call.1} parent=5 // pred_fallthru
        _
      %p582 = scmp.le.s32.totalorder 2, %s16
      // Predicated region
      $region53: #{tpu_custom_call.1} parent=5 // pred_check
        %p583 = pneg %p582
      $region54: #{tpu_custom_call.1} parent=5 // pred_check_branch
        %585 = sbr.rel (%p583) target = $region56
      $region55: #{tpu_custom_call.1} parent=5 // pred_region
        %s586 = ssub.s32 %s16, 2
        // Predicated region
        $region57: #{tpu_custom_call.1} parent=55 // pred_check
          %p587 = pneg %p202
        $region58: #{tpu_custom_call.1} parent=55 // pred_check_branch
          %589 = sbr.rel (%p587) target = $region60
        $region59: #{tpu_custom_call.1} parent=55 // pred_region
          %s590 = sand.u32 %s187, 1
          %s591 = scalar_lea.sflag [#allocation3], %s590
          %s592 = sand.u32 %s187, 1
          %s593 = smul.addr %s592, 16
          %s594 = scalar_lea.vmem [#allocation2], %s593
          %595 = dma.done %s591, 256
        $region60: #{tpu_custom_call.1} parent=55 // pred_fallthru
          _
      $region56: #{tpu_custom_call.1} parent=5 // pred_fallthru
        _
    $region6: #{tpu_custom_call.1} parent=1 // loop_footer
      %s20 = sadd.s32 1, %s16
    $region7: #{tpu_custom_call.1} parent=1 // loop_footer_branch
      %15 = sbr.rel target = $region3
    $region8: #{tpu_custom_call.1} parent=1 // loop_exit
      _
    %596 = vsyncpa [#allocation3], 1
    %s597 = scalar_lea.sflag [#allocation3], 1
    %598 = vsyncpa %s597, 1

</llo_original>
